<compile_context>
chip_gen: v7x
topology: tpu7x:2x2x1
jax: 0.10.0
libtpu: 0.0.40
codegen_flags: <defaults>
</compile_context>

<pallas_src>
import math

import jax
import jax.numpy as jnp
from jax.experimental import pallas as pl
from jax.experimental.pallas import tpu as pltpu

ALPHA = 1.0
GAMMA = 2.0
WEIGHT = jnp.array([1.0, 5.0, 5.0], dtype=jnp.float32)  # deterministic, from __init__

_LANE = 128
_TARGET_BLOCK_ROWS = 3072            # ~2.3 MiB of logical (bf16 x + f32 y) input / step
_VMEM_LIMIT = 32 * 1024 * 1024       # safe on v5e (raises 16 MiB default), v6e, v7x


def _round_up(x, m):
    return ((x + m - 1) // m) * m


def _make_kernel(n_total, nb, block_rows, tile_rows):
    """Kernel accumulating UNWEIGHTED bce_with_logits sums per (row % tile_rows, lane)."""
    groups = block_rows // tile_rows
    block_elems = block_rows * _LANE

    def kernel(x_ref, y_ref, o_ref):
        @pl.when(pl.program_id(1) == 0)
        def _init():
            o_ref[...] = jnp.zeros_like(o_ref)

        x = x_ref[...].astype(jnp.float32)
        y = y_ref[...].astype(jnp.float32)

        # Numerically-stable BCE with logits (PyTorch formula), log1p for accuracy:
        #   l = max(x, 0) - x*y + log1p(exp(-|x|))
        per = jnp.maximum(x, 0.0) - x * y + jnp.log1p(jnp.exp(-jnp.abs(x)))

        # Mask padded / out-of-bounds tail elements (value-independent & robust).
        block_idx = pl.program_id(0) * nb + pl.program_id(1)
        rem = n_total - block_idx * block_elems          # valid elems left in this block
        row_iota = jax.lax.broadcasted_iota(jnp.int32, (block_rows, _LANE), 0)
        lane_iota = jax.lax.broadcasted_iota(jnp.int32, (block_rows, _LANE), 1)
        local_flat = row_iota * _LANE + lane_iota
        per = jnp.where(local_flat < rem, per, 0.0)

        # Per-(sublane-period, lane) partial sums; channel weight applied in wrapper.
        o_ref[...] += per.reshape(groups, tile_rows, _LANE).sum(axis=0)[None]

    return kernel


def focal_loss(inputs, targets, *, alpha=ALPHA, gamma=GAMMA, weight=WEIGHT,
               target_block_rows=_TARGET_BLOCK_ROWS, num_parallel=1):
    """inputs/targets: (..., C) arrays with C == weight.shape[0]. Returns scalar loss."""
    assert inputs.shape == targets.shape
    c = int(weight.shape[0])
    assert inputs.shape[-1] == c

    n_total = int(inputs.size)                 # element count used by 'mean'
    assert 0 < n_total < 2**31                 # in-kernel masking uses int32 flat indices

    # Periodic per-(row, lane) weight tile: weight[(row*128 + lane) % c] has row-period
    # c / gcd(c, 128); round up to a multiple of 8 sublanes (c=3 -> 24 rows).
    period = c // math.gcd(c, _LANE)
    tile_rows = (period * 8) // math.gcd(period, 8)          # lcm(period, 8)
    tile_elems = tile_rows * _LANE
    flat_idx = jnp.arange(tile_elems, dtype=jnp.int32)
    w_tile = weight.astype(jnp.float32)[flat_idx % c].reshape(tile_rows, _LANE)

    # Flat, lane-dense view (metadata-only reshape; no transpose, no dtype upcast).
    xf = jnp.reshape(inputs, (-1,))
    yf = jnp.reshape(targets, (-1,))

    # Pad only when needed, and only to the next tile_rows*128 boundary (padded
    # values are irrelevant: they are masked in-kernel against n_total).
    n_padded = _round_up(n_total, tile_elems)
    if n_padded != n_total:
        xf = jnp.pad(xf, (0, n_padded - n_total))
        yf = jnp.pad(yf, (0, n_padded - n_total))
    rows = n_padded // _LANE                   # always a multiple of tile_rows (>= 8)
    x2 = xf.reshape(rows, _LANE)
    y2 = yf.reshape(rows, _LANE)

    # Block tiling along the row axis.
    block_rows = min(max(tile_rows, (target_block_rows // tile_rows) * tile_rows), rows)
    blocks_data = -(-rows // block_rows)                     # cdiv
    nb = -(-blocks_data // num_parallel)                     # blocks per parallel slice

    if num_parallel == 1:
        def col_map(p, j):
            return (j, 0)
    else:
        # Clamp so extra blocks of the last parallel slice re-read valid data
        # (their contribution is masked to zero in-kernel anyway).
        def col_map(p, j):
            return (jnp.minimum(p * nb + j, blocks_data - 1), 0)

    kernel = _make_kernel(n_total, nb, block_rows, tile_rows)

    partials = pl.pallas_call(
        kernel,
        out_shape=jax.ShapeDtypeStruct((num_parallel, tile_rows, _LANE), jnp.float32),
        grid_spec=pltpu.PrefetchScalarGridSpec(
            num_scalar_prefetch=0,
            grid=(num_parallel, nb),
            in_specs=[
                pl.BlockSpec((block_rows, _LANE), col_map),   # x tiles (orig dtype)
                pl.BlockSpec((block_rows, _LANE), col_map),   # y tiles (orig dtype)
            ],
            out_specs=pl.BlockSpec((1, tile_rows, _LANE), lambda p, j: (p, 0, 0)),
        ),
        compiler_params=pltpu.CompilerParams(
            dimension_semantics=("parallel", "arbitrary"),
            vmem_limit_bytes=_VMEM_LIMIT,
        ),
    )(x2, y2)

    # Scalar epilogue (once, outside the hot loop): apply channel weights, mean,
    # then the focal transform.  Mean of a scalar is the identity.
    total = jnp.sum(jnp.sum(partials, axis=0) * w_tile)
    bce = total / jnp.float32(n_total)
    pt = jnp.exp(-bce)
    return alpha * (1.0 - pt) ** gamma * bce


def _reference(inputs, targets, alpha=ALPHA, gamma=GAMMA, weight=WEIGHT):
    x = inputs.astype(jnp.float32)
    y = targets.astype(jnp.float32)
    w = weight.reshape((1,) * (x.ndim - 1) + (-1,)).astype(jnp.float32)
    per = w * (jnp.maximum(x, 0.0) - x * y + jnp.log1p(jnp.exp(-jnp.abs(x))))
    bce = jnp.mean(per)
    pt = jnp.exp(-bce)
    return alpha * (1.0 - pt) ** gamma * bce


if __name__ == "__main__":
    key = jax.random.PRNGKey(0)
    k1, k2 = jax.random.split(key)
    B, L, C = 2, 8, 3  # small shapes; C must match weight=[1.0, 5.0, 5.0]

    # bf16 logits pass straight through to the kernel (no wrapper upcast).
    inputs = jax.random.normal(k1, (B, L, C), dtype=jnp.float32).astype(jnp.bfloat16)
    targets = jax.random.bernoulli(k2, 0.5, (B, L, C)).astype(jnp.float32)

    loss = focal_loss(inputs, targets)
    jax.block_until_ready(loss)
    ref = _reference(inputs, targets)
    assert jnp.allclose(loss, ref, atol=1e-5, rtol=1e-5), (loss, ref)

    # Ragged / multi-block exercise of the masking path (still small).
    B2, L2 = 7, 321  # n_total = 6741 -> padded to 9216, 3 blocks of 24 rows
    x_big = jax.random.normal(k1, (B2, L2, C), dtype=jnp.float32)
    y_big = jax.random.bernoulli(k2, 0.5, (B2, L2, C)).astype(jnp.float32)
    loss2 = focal_loss(x_big, y_big, target_block_rows=24)
    jax.block_until_ready(loss2)
    ref2 = _reference(x_big, y_big)
    assert jnp.allclose(loss2, ref2, atol=1e-5, rtol=1e-5), (loss2, ref2)

    print("KERNEL_OK")
</pallas_src>

<mosaic_0001>
module attributes {stable_mosaic.version = 11 : i64} {
  func.func @kernel(%arg0: i32, %arg1: i32, %arg2: memref<24x128xbf16, #tpu.memory_space<vmem>>, %arg3: memref<24x128xf32, #tpu.memory_space<vmem>>, %arg4: memref<1x24x128xf32, #tpu.memory_space<vmem>>) attributes {dimension_semantics = [#tpu.dimension_semantics<parallel>, #tpu.dimension_semantics<arbitrary>], iteration_bounds = array<i64: 1, 1>, scalar_prefetch = 0 : i64, scratch_operands = 0 : i64, tpu.core_type = #tpu.core_type<tc>, window_params = [{transform_indices = @transform_0, window_bounds = array<i64: 24, 128>}, {transform_indices = @transform_1, window_bounds = array<i64: 24, 128>}, {transform_indices = @transform_2, window_bounds = array<i64: 1, 24, 128>}]} {
    %c0_i32 = arith.constant 0 : i32
    %0 = arith.cmpi eq, %arg1, %c0_i32 : i32
    %1 = arith.extui %0 : i1 to i32
    %c0_i32_0 = arith.constant 0 : i32
    %2 = arith.cmpi ne, %1, %c0_i32_0 : i32
    scf.if %2 {
      %cst_13 = arith.constant 0.000000e+00 : f32
      %35 = vector.broadcast %cst_13 : f32 to vector<1x24x128xf32>
      %c0_14 = arith.constant 0 : index
      %c0_15 = arith.constant 0 : index
      %c0_16 = arith.constant 0 : index
      %36 = vector.load %arg4[%c0_14, %c0_15, %c0_16] : memref<1x24x128xf32, #tpu.memory_space<vmem>>, vector<1x24x128xf32>
      tpu.vector_store %arg4[%c0_14, %c0_15, %c0_16], %35 {strides = array<i32>} : memref<1x24x128xf32, #tpu.memory_space<vmem>>, vector<1x24x128xf32>,
    } else {
    }
    %c0 = arith.constant 0 : index
    %c0_1 = arith.constant 0 : index
    %3 = vector.load %arg2[%c0, %c0_1] : memref<24x128xbf16, #tpu.memory_space<vmem>>, vector<24x128xbf16>
    %4 = arith.extf %3 : vector<24x128xbf16> to vector<24x128xf32>
    %c0_2 = arith.constant 0 : index
    %c0_3 = arith.constant 0 : index
    %5 = vector.load %arg3[%c0_2, %c0_3] : memref<24x128xf32, #tpu.memory_space<vmem>>, vector<24x128xf32>
    %cst = arith.constant 0.000000e+00 : f32
    %6 = vector.broadcast %cst : f32 to vector<24x128xf32>
    %7 = arith.maximumf %4, %6 : vector<24x128xf32>
    %8 = arith.mulf %4, %5 : vector<24x128xf32>
    %9 = arith.subf %7, %8 : vector<24x128xf32>
    %10 = math.absf %4 : vector<24x128xf32>
    %cst_4 = arith.constant 0.000000e+00 : f32
    %11 = vector.broadcast %cst_4 : f32 to vector<24x128xf32>
    %12 = arith.subf %11, %10 : vector<24x128xf32>
    %13 = math.exp %12 : vector<24x128xf32>
    %14 = math.log1p %13 : vector<24x128xf32>
    %15 = arith.addf %9, %14 : vector<24x128xf32>
    %c1_i32 = arith.constant 1 : i32
    %16 = arith.muli %arg0, %c1_i32 : i32
    %17 = arith.addi %16, %arg1 : i32
    %c3072_i32 = arith.constant 3072 : i32
    %18 = arith.muli %17, %c3072_i32 : i32
    %c48_i32 = arith.constant 48 : i32
    %19 = arith.subi %c48_i32, %18 : i32
    %20 = tpu.iota {dimensions = array<i32: 0>} : vector<24x128xi32>
    %21 = tpu.iota {dimensions = array<i32: 1>} : vector<24x128xi32>
    %c128_i32 = arith.constant 128 : i32
    %22 = vector.broadcast %c128_i32 : i32 to vector<24x128xi32>
    %23 = arith.muli %20, %22 : vector<24x128xi32>
    %24 = arith.addi %23, %21 : vector<24x128xi32>
    %25 = vector.broadcast %19 : i32 to vector<24x128xi32>
    %26 = arith.cmpi slt, %24, %25 : vector<24x128xi32>
    %cst_5 = arith.constant 0.000000e+00 : f32
    %27 = vector.broadcast %cst_5 : f32 to vector<24x128xf32>
    %28 = arith.select %26, %15, %27 : vector<24x128xi1>, vector<24x128xf32>
    %c0_6 = arith.constant 0 : index
    %c0_7 = arith.constant 0 : index
    %c0_8 = arith.constant 0 : index
    %29 = vector.load %arg4[%c0_6, %c0_7, %c0_8] : memref<1x24x128xf32, #tpu.memory_space<vmem>>, vector<1x24x128xf32>
    %30 = vector.shape_cast %28 : vector<24x128xf32> to vector<1x24x128xf32>
    %cst_9 = arith.constant dense<0.000000e+00> : vector<24x128xf32>
    %31 = vector.multi_reduction <add>, %30, %cst_9 [0] : vector<1x24x128xf32> to vector<24x128xf32>
    %32 = vector.shape_cast %31 : vector<24x128xf32> to vector<1x24x128xf32>
    %33 = arith.addf %29, %32 : vector<1x24x128xf32>
    %c0_10 = arith.constant 0 : index
    %c0_11 = arith.constant 0 : index
    %c0_12 = arith.constant 0 : index
    %34 = vector.load %arg4[%c0_10, %c0_11, %c0_12] : memref<1x24x128xf32, #tpu.memory_space<vmem>>, vector<1x24x128xf32>
    tpu.vector_store %arg4[%c0_10, %c0_11, %c0_12], %33 {strides = array<i32>} : memref<1x24x128xf32, #tpu.memory_space<vmem>>, vector<1x24x128xf32>,
    return
  }
  func.func @transform_0(%arg0: i32, %arg1: i32) -> (i32, i32) {
    %c0_i32 = arith.constant 0 : i32
    %c0_i32_0 = arith.constant 0 : i32
    return %arg1, %c0_i32 : i32, i32
  }
  func.func @transform_1(%arg0: i32, %arg1: i32) -> (i32, i32) {
    %c0_i32 = arith.constant 0 : i32
    %c0_i32_0 = arith.constant 0 : i32
    return %arg1, %c0_i32 : i32, i32
  }
  func.func @transform_2(%arg0: i32, %arg1: i32) -> (i32, i32, i32) {
    %c0_i32 = arith.constant 0 : i32
    %c0_i32_0 = arith.constant 0 : i32
    %c0_i32_1 = arith.constant 0 : i32
    return %arg0, %c0_i32, %c0_i32_0 : i32, i32, i32
  }
}

</mosaic_0001>

<llo_original>
// kernel: tpu_custom_call.1
$region0: #{tpu_custom_call.1}
  #allocation0 [shape = 'u32[]', space=smem, size = 0x4, offset = 0x4, fixed_abs, tag = 'smem constant byte address 0x4 - core index']
  #allocation1 [shape = 'u32[144,128]{1,0:T(1,128)}', space=vmem, size = 0x12000, scoped, tag = 'internal scratch']
  %s0 = inlined_call_operand.hbm [shape: bf16[24,128], index: 0, kind: input, shape index: {}]
  %s1 = inlined_call_operand.hbm [shape: f32[24,128], index: 1, kind: input, shape index: {}]
  %s2 = inlined_call_operand.hbm [shape: f32[1,24,128], index: 2, kind: output, shape index: {}]
  %s3 = sld [smem:[#allocation0]]
  $region30: #{tpu_custom_call.1} parent=0
    _
  %s5 = ssub.s32 1, %s3
  %s6 = scalar_select 0, %s5, %s3
  $region1: #{tpu_custom_call.1} parent=0
    #allocation2 [shape = 'u8[6144]{0}', space=vmem, size = 0x1800, scoped, tag = 'input window, operand 0, single buffered']
    #allocation3 [shape = 's32[1]{0}', space=sflag, size = 0x4, scoped, tag = 'scoped memory for tpu_custom_call.1']
    #allocation4 [shape = 's32[1]{0}', space=sflag, size = 0x4, scoped, tag = 'scoped memory for tpu_custom_call.1']
    #allocation5 [shape = 'u8[12288]{0}', space=vmem, size = 0x3000, scoped, tag = 'input window, operand 1, single buffered']
    #allocation6 [shape = 's32[1]{0}', space=sflag, size = 0x4, scoped, tag = 'scoped memory for tpu_custom_call.1']
    #allocation7 [shape = 'u8[12288]{0}', space=vmem, size = 0x3000, scoped, tag = 'output window, operand 0, single buffered']
    %7 = vsyncpa [#allocation3], 0
    %8 = vsyncpa [#allocation6], 0
    %9 = vsyncpa [#allocation4], 0
    // Predicated region
    $region2: #{tpu_custom_call.1} parent=1 // pred_check
      _
    $region3: #{tpu_custom_call.1} parent=1 // pred_check_branch
      %11 = sbr.rel (0) target = $region5
    $region4: #{tpu_custom_call.1} parent=1 // pred_region
      %s13 = ssub.s32 192, 192
      %14 = vsyncadd [#allocation3], %s13
      %s15 = sshll.u32 [#allocation2], 4
      %s16 = int_to_ptr.vmem [resolvable:$true] %s15
      %21 = dma.hbm_to_vmem [thread:$0]  %s0, 192, %s16, [#allocation3], 64, 64, 4
    $region5: #{tpu_custom_call.1} parent=1 // pred_fallthru
      _
    // Predicated region
    $region6: #{tpu_custom_call.1} parent=1 // pred_check
      _
    $region7: #{tpu_custom_call.1} parent=1 // pred_check_branch
      %23 = sbr.rel (0) target = $region9
    $region8: #{tpu_custom_call.1} parent=1 // pred_region
      %s25 = ssub.s32 384, 384
      %26 = vsyncadd [#allocation6], %s25
      %s27 = sshll.u32 [#allocation5], 4
      %s28 = int_to_ptr.vmem [resolvable:$true] %s27
      %33 = dma.hbm_to_vmem [thread:$0]  %s1, 384, %s28, [#allocation6], 128, 128, 8
    $region9: #{tpu_custom_call.1} parent=1 // pred_fallthru
      _
    // Predicated region
    $region10: #{tpu_custom_call.1} parent=1 // pred_check
      _
    $region11: #{tpu_custom_call.1} parent=1 // pred_check_branch
      %35 = sbr.rel (0) target = $region13
    $region12: #{tpu_custom_call.1} parent=1 // pred_region
      %36 = dma.done [#allocation3], 192
    $region13: #{tpu_custom_call.1} parent=1 // pred_fallthru
      _
    // Predicated region
    $region14: #{tpu_custom_call.1} parent=1 // pred_check
      _
    $region15: #{tpu_custom_call.1} parent=1 // pred_check_branch
      %38 = sbr.rel (0) target = $region17
    $region16: #{tpu_custom_call.1} parent=1 // pred_region
      %39 = dma.done [#allocation6], 384
    $region17: #{tpu_custom_call.1} parent=1 // pred_fallthru
      _
    %p40 = scmp.eq.s32.totalorder 0, 0
    // Predicated region
    $region18: #{tpu_custom_call.1} parent=1 // pred_check
      %p41 = pneg %p40
    $region19: #{tpu_custom_call.1} parent=1 // pred_check_branch
      %43 = sbr.rel (%p41) target = $region21
    $region20: #{tpu_custom_call.1} parent=1 // pred_region
      %44 = vst [vmem:[#allocation7] sm:$0xff] 0.0
      %45 = vst [vmem:[#allocation7 + $0x8] sm:$0xff] 0.0
      %46 = vst [vmem:[#allocation7 + $0x10] sm:$0xff] 0.0
    $region21: #{tpu_custom_call.1} parent=1 // pred_fallthru
      _
    %v47 = vld [vmem:[#allocation2] sm:$0xf]
    %v48 = vld [vmem:[#allocation2 + $0x4] sm:$0xf]
    %v49 = vld [vmem:[#allocation2 + $0x8] sm:$0xf]
    %v50 = vunpack.c.l.bf16 %v47
    %v51 = vunpack.c.l.bf16 %v48
    %v52 = vunpack.c.l.bf16 %v49
    %v53 = vld [vmem:[#allocation5] sm:$0xff]
    %v54 = vld [vmem:[#allocation5 + $0x8] sm:$0xff]
    %v55 = vld [vmem:[#allocation5 + $0x10] sm:$0xff]
    %v56 = vmax.f32 %v50, 0.0
    %v57 = vmax.f32 %v51, 0.0
    %v58 = vmax.f32 %v52, 0.0
    %v59 = vmul.f32 %v50, %v53
    %v60 = vmul.f32 %v51, %v54
    %v61 = vmul.f32 %v52, %v55
    %v62 = vsub.f32 %v56, %v59
    %v63 = vsub.f32 %v57, %v60
    %v64 = vsub.f32 %v58, %v61
    %v65 = vand.u32 2147483647, %v50
    %v66 = vand.u32 2147483647, %v51
    %v67 = vand.u32 2147483647, %v52
    %v68 = vsub.f32 0.0, %v65
    %v69 = vsub.f32 0.0, %v66
    %v70 = vsub.f32 0.0, %v67
    %v71 = vmul.f32 %v68, 1.442695
    %v72 = vpow.pop %v71
    %v73 = vmul.f32 %v69, 1.442695
    %v74 = vpow.pop %v73
    %v75 = vmul.f32 %v70, 1.442695
    %v76 = vpow.pop %v75
    %v77 = vadd.f32 %v72, 1.0
    %v78 = vlog2.pop %v77
    %v79 = vmul.f32 %v78, 0.6931472
    %v80 = vmul.f32 -0.5, %v72
    %v81 = vadd.f32 %v80, 1.0
    %v82 = vmul.f32 %v81, %v72
    %v83 = vand.u32 2147483647, %v72
    %vm84 = vcmp.lt.f32.partialorder %v83, 0.0004427343
    %v85 = vsel %vm84, %v82, %v79
    %v86 = vadd.f32 %v74, 1.0
    %v87 = vlog2.pop %v86
    %v88 = vmul.f32 %v87, 0.6931472
    %v89 = vmul.f32 -0.5, %v74
    %v90 = vadd.f32 %v89, 1.0
    %v91 = vmul.f32 %v90, %v74
    %v92 = vand.u32 2147483647, %v74
    %vm93 = vcmp.lt.f32.partialorder %v92, 0.0004427343
    %v94 = vsel %vm93, %v91, %v88
    %v95 = vadd.f32 %v76, 1.0
    %v96 = vlog2.pop %v95
    %v97 = vmul.f32 %v96, 0.6931472
    %v98 = vmul.f32 -0.5, %v76
    %v99 = vadd.f32 %v98, 1.0
    %v100 = vmul.f32 %v99, %v76
    %v101 = vand.u32 2147483647, %v76
    %vm102 = vcmp.lt.f32.partialorder %v101, 0.0004427343
    %v103 = vsel %vm102, %v100, %v97
    %v104 = vadd.f32 %v62, %v85
    %v105 = vadd.f32 %v63, %v94
    %v106 = vadd.f32 %v64, %v103
    %s107 = sadd.s32 0, 0
    %s108 = smul.u32 %s107, 3072
    %s109 = ssub.s32 48, %s108
    %v110 = vlaneseq
    %v111 = vshrl.u32 %v110, 7
    %v112 = vadd.s32 %v111, 8
    %v113 = vadd.s32 %v111, 16
    %v114 = vlaneseq
    %v115 = vand.u32 %v114, 127
    %v116 = vmul.u32 %v111, 128
    %v117 = vmul.u32 %v112, 128
    %v118 = vmul.u32 %v113, 128
    %v119 = vadd.s32 %v116, %v115
    %v120 = vadd.s32 %v117, %v115
    %v121 = vadd.s32 %v118, %v115
    %v122 = vstv %s109
    %vm123 = vcmp.lt.s32.totalorder %v119, %v122
    %vm124 = vcmp.lt.s32.totalorder %v120, %v122
    %vm125 = vcmp.lt.s32.totalorder %v121, %v122
    %v126 = vsel %vm123, %v104, 0.0
    %v127 = vsel %vm124, %v105, 0.0
    %v128 = vsel %vm125, %v106, 0.0
    %v129 = vld [vmem:[#allocation7] sm:$0xff]
    %v130 = vld [vmem:[#allocation7 + $0x8] sm:$0xff]
    %v131 = vld [vmem:[#allocation7 + $0x10] sm:$0xff]
    %v132 = vadd.f32 %v126, 0.0
    %v133 = vadd.f32 %v127, 0.0
    %v134 = vadd.f32 %v128, 0.0
    %v135 = vadd.f32 %v129, %v132
    %v136 = vadd.f32 %v130, %v133
    %v137 = vadd.f32 %v131, %v134
    %138 = vst [vmem:[#allocation7] sm:$0xff] %v135
    %139 = vst [vmem:[#allocation7 + $0x8] sm:$0xff] %v136
    %140 = vst [vmem:[#allocation7 + $0x10] sm:$0xff] %v137
    // Predicated region
    $region22: #{tpu_custom_call.1} parent=1 // pred_check
      _
    $region23: #{tpu_custom_call.1} parent=1 // pred_check_branch
      %142 = sbr.rel (0) target = $region25
    $region24: #{tpu_custom_call.1} parent=1 // pred_region
      %s144 = ssub.s32 384, 384
      %145 = vsyncadd [#allocation4], %s144
      %s146 = sshll.u32 [#allocation7], 4
      %s147 = int_to_ptr.vmem [resolvable:$true] %s146
      %152 = dma.vmem_to_hbm [thread:$0]  %s147, 384, %s2, [#allocation4], 128, 128, 8
    $region25: #{tpu_custom_call.1} parent=1 // pred_fallthru
      _
    // Predicated region
    $region26: #{tpu_custom_call.1} parent=1 // pred_check
      _
    $region27: #{tpu_custom_call.1} parent=1 // pred_check_branch
      %154 = sbr.rel (0) target = $region29
    $region28: #{tpu_custom_call.1} parent=1 // pred_region
      %155 = dma.done [#allocation4], 384
    $region29: #{tpu_custom_call.1} parent=1 // pred_fallthru
      _
    %156 = vsyncpa [#allocation3], 1
    %157 = vsyncpa [#allocation6], 1
    %158 = vsyncpa [#allocation4], 1

</llo_original>
